<compile_context>
chip_gen: v7x
topology: tpu7x:2x2x1
jax: 0.10.0
libtpu: 0.0.40
codegen_flags: <defaults>
</compile_context>

<pallas_src>
import functools

import jax
import jax.numpy as jnp
from jax import lax
from jax.experimental import pallas as pl
from jax.experimental.pallas import tpu as pltpu


# ----------------------------------------------------------------------------
# Fused kernel: one grid step == one batch element (all heads).
# ----------------------------------------------------------------------------
def _fused_attention_kernel(x_ref, wqkv_ref, wout_ref, bout_ref, o_ref, *,
                            heads, dim_head, scale, compute_dtype):
    n = x_ref.shape[1]
    inner = heads * dim_head

    # ---- to_qkv projection (no bias): bf16 operands, f32 accumulation ------
    x = x_ref[0].astype(compute_dtype)                      # (n, d)
    w_qkv = wqkv_ref[...].astype(compute_dtype)             # (d, 3*inner)
    qkv = jnp.dot(x, w_qkv, preferred_element_type=jnp.float32)  # (n, 3*inner) f32

    # Fold the softmax scale into q (cheaper than scaling the (n, n) logits).
    q = qkv[:, 0 * inner:1 * inner] * scale                 # (n, inner) f32
    k = qkv[:, 1 * inner:2 * inner]
    v = qkv[:, 2 * inner:3 * inner]

    # ---- multi-head attention, all heads this grid step --------------------
    # `heads` is small; a static unrolled loop keeps everything 2-D (no
    # lane-splitting reshape/transpose inside the kernel) while the per-step
    # DMA / overhead is amortized over every head of the batch element.
    head_outs = []
    for h in range(heads):
        lo, hi = h * dim_head, (h + 1) * dim_head
        qh = q[:, lo:hi].astype(compute_dtype)              # (n, dh)
        kh = k[:, lo:hi].astype(compute_dtype)              # (n, dh)
        vh = v[:, lo:hi].astype(compute_dtype)              # (n, dh)

        # 'i d, j d -> i j': contract last dims directly, no explicit k.T.
        sim = lax.dot_general(qh, kh, (((1,), (1,)), ((), ())),
                              preferred_element_type=jnp.float32)  # (n, n) f32

        # Numerically-stable softmax, all in f32; reciprocal on the EUP.
        sim = sim - jnp.max(sim, axis=-1, keepdims=True)
        p = jnp.exp(sim)
        inv = pl.reciprocal(jnp.sum(p, axis=-1, keepdims=True), approx=True)
        attn = p * inv                                       # (n, n) f32

        head_outs.append(
            jnp.dot(attn.astype(compute_dtype), vh,
                    preferred_element_type=jnp.float32))     # (n, dh) f32

    # 'h n d -> n (h d)' — lane-dense merge, stays in VMEM only.
    merged = jnp.concatenate(head_outs, axis=-1)             # (n, inner) f32

    # ---- to_out projection (with bias) --------------------------------------
    w_out = wout_ref[...].astype(compute_dtype)              # (inner, d)
    y = jnp.dot(merged.astype(compute_dtype), w_out,
                preferred_element_type=jnp.float32) + bout_ref[...]   # (n, d)
    o_ref[0] = y.astype(o_ref.dtype)


# ----------------------------------------------------------------------------
# Wrapper
# ----------------------------------------------------------------------------
def attention_forward(x, params, heads, *, compute_dtype=jnp.bfloat16):
    """x: (b, n, dim) -> (b, n, dim).  Matches Attention.forward (dropout p=0)."""
    b, n, d = x.shape
    w_qkv = params["w_qkv"]          # (dim, 3*inner)
    w_out = params["w_out"]          # (inner, dim)
    b_out = params["b_out"]          # (dim,)
    inner = w_qkv.shape[1] // 3
    dim_head = inner // heads
    scale = dim_head ** (-0.5)

    kernel = functools.partial(
        _fused_attention_kernel,
        heads=heads, dim_head=dim_head, scale=scale, compute_dtype=compute_dtype)

    return pl.pallas_call(
        kernel,
        out_shape=jax.ShapeDtypeStruct((b, n, d), x.dtype),
        grid=(b,),
        in_specs=[
            # one batch element per grid step
            pl.BlockSpec((1, n, d), lambda i: (i, 0, 0)),
            # weights / bias: constant index_map -> resident in VMEM
            pl.BlockSpec((d, 3 * inner), lambda i: (0, 0)),
            pl.BlockSpec((inner, d), lambda i: (0, 0)),
            pl.BlockSpec((1, d), lambda i: (0, 0)),
        ],
        out_specs=pl.BlockSpec((1, n, d), lambda i: (i, 0, 0)),
        compiler_params=pltpu.CompilerParams(
            dimension_semantics=("parallel",)),   # batch steps are independent
    )(x, w_qkv, w_out, b_out.reshape(1, d))


# ----------------------------------------------------------------------------
# Pure-JAX reference (f32) for correctness check
# ----------------------------------------------------------------------------
def attention_reference(x, params, heads):
    b, n, d = x.shape
    w_qkv, w_out, b_out = params["w_qkv"], params["w_out"], params["b_out"]
    inner = w_qkv.shape[1] // 3
    dh = inner // heads
    scale = dh ** (-0.5)

    qkv = x @ w_qkv
    q, k, v = jnp.split(qkv, 3, axis=-1)

    def sh(t):  # 'b n (h d) -> b h n d'
        return t.reshape(b, n, heads, dh).transpose(0, 2, 1, 3)

    q, k, v = sh(q), sh(k), sh(v)
    sim = jnp.einsum("bhid,bhjd->bhij", q, k) * scale
    attn = jax.nn.softmax(sim, axis=-1)
    out = jnp.einsum("bhij,bhjd->bhid", attn, v)
    out = out.transpose(0, 2, 1, 3).reshape(b, n, inner)
    return out @ w_out + b_out


if __name__ == "__main__":
    # Small shapes consistent with the module's forward.
    batch, seq, dim = 2, 8, 32
    heads, dim_head = 4, 16
    inner = heads * dim_head

    key = jax.random.PRNGKey(0)
    kx, kq, ko, kb = jax.random.split(key, 4)

    x = jax.random.normal(kx, (batch, seq, dim), dtype=jnp.float32)
    params = {
        "w_qkv": jax.random.normal(kq, (dim, 3 * inner), jnp.float32) * 0.05,
        "w_out": jax.random.normal(ko, (inner, dim), jnp.float32) * 0.05,
        "b_out": jax.random.normal(kb, (dim,), jnp.float32) * 0.05,
    }

    y_ref = attention_reference(x, params, heads)

    # Exact-path check (f32 MXU operands): tight tolerance.
    y_f32 = jax.block_until_ready(
        attention_forward(x, params, heads, compute_dtype=jnp.float32))
    assert y_f32.shape == (batch, seq, dim)
    assert jnp.allclose(y_f32, y_ref, atol=1e-3, rtol=1e-3), "f32 path mismatch"

    # Optimized path (bf16 MXU operands, f32 accumulation / f32 softmax).
    y = jax.block_until_ready(attention_forward(x, params, heads))
    assert y.shape == (batch, seq, dim)
    assert jnp.allclose(y, y_ref, atol=3e-2, rtol=3e-2), "bf16 path mismatch"

    print("KERNEL_OK")
</pallas_src>

<mosaic_0001>
module attributes {stable_mosaic.version = 11 : i64} {
  func.func @_fused_attention_kernel(%arg0: i32, %arg1: memref<1x8x32xf32, #tpu.memory_space<vmem>>, %arg2: memref<32x192xf32, #tpu.memory_space<vmem>>, %arg3: memref<64x32xf32, #tpu.memory_space<vmem>>, %arg4: memref<1x32xf32, #tpu.memory_space<vmem>>, %arg5: memref<1x8x32xf32, #tpu.memory_space<vmem>>) attributes {dimension_semantics = [#tpu.dimension_semantics<parallel>], iteration_bounds = array<i64: 2>, scalar_prefetch = 0 : i64, scratch_operands = 0 : i64, tpu.core_type = #tpu.core_type<tc>, window_params = [{transform_indices = @transform_0, window_bounds = array<i64: 1, 8, 32>}, {pipeline_mode = #tpu.pipeline_mode<synchronous>, transform_indices = @transform_1, window_bounds = array<i64: 32, 192>}, {pipeline_mode = #tpu.pipeline_mode<synchronous>, transform_indices = @transform_2, window_bounds = array<i64: 64, 32>}, {pipeline_mode = #tpu.pipeline_mode<synchronous>, transform_indices = @transform_3, window_bounds = array<i64: 1, 32>}, {transform_indices = @transform_4, window_bounds = array<i64: 1, 8, 32>}]} {
    %c0 = arith.constant 0 : index
    %c0_0 = arith.constant 0 : index
    %c0_1 = arith.constant 0 : index
    %0 = vector.load %arg1[%c0, %c0_0, %c0_1] : memref<1x8x32xf32, #tpu.memory_space<vmem>>, vector<1x8x32xf32>
    %1 = vector.shape_cast %0 : vector<1x8x32xf32> to vector<8x32xf32>
    %c0_2 = arith.constant 0 : index
    %c0_3 = arith.constant 0 : index
    %2 = vector.load %arg2[%c0_2, %c0_3] : memref<32x192xf32, #tpu.memory_space<vmem>>, vector<32x192xf32>
    %cst = arith.constant dense<0.000000e+00> : vector<8x192xf32>
    %3 = tpu.matmul %1, %2, %cst {dimension_numbers = #tpu.dot_dimension_numbers<[1], [0], [0], [1], [0, 0, 1, 1], [], []>} : vector<8x32xf32>, vector<32x192xf32>, vector<8x192xf32> -> vector<8x192xf32>
    %4 = vector.extract_strided_slice %3 {offsets = [0, 0], sizes = [8, 64], strides = [1, 1]} : vector<8x192xf32> to vector<8x64xf32>
    %cst_4 = arith.constant 2.500000e-01 : f32
    %5 = vector.broadcast %cst_4 : f32 to vector<8x64xf32>
    %6 = arith.mulf %4, %5 : vector<8x64xf32>
    %7 = vector.extract_strided_slice %3 {offsets = [0, 64], sizes = [8, 64], strides = [1, 1]} : vector<8x192xf32> to vector<8x64xf32>
    %8 = vector.extract_strided_slice %3 {offsets = [0, 128], sizes = [8, 64], strides = [1, 1]} : vector<8x192xf32> to vector<8x64xf32>
    %9 = vector.extract_strided_slice %6 {offsets = [0, 0], sizes = [8, 16], strides = [1, 1]} : vector<8x64xf32> to vector<8x16xf32>
    %10 = vector.extract_strided_slice %7 {offsets = [0, 0], sizes = [8, 16], strides = [1, 1]} : vector<8x64xf32> to vector<8x16xf32>
    %11 = vector.extract_strided_slice %8 {offsets = [0, 0], sizes = [8, 16], strides = [1, 1]} : vector<8x64xf32> to vector<8x16xf32>
    %cst_5 = arith.constant dense<0.000000e+00> : vector<8x8xf32>
    %12 = tpu.matmul %9, %10, %cst_5 {dimension_numbers = #tpu.dot_dimension_numbers<[1], [1], [0], [0], [0, 0, 1, 0], [], []>} : vector<8x16xf32>, vector<8x16xf32>, vector<8x8xf32> -> vector<8x8xf32>
    %cst_6 = arith.constant dense<0xFF800000> : vector<8xf32>
    %13 = vector.multi_reduction <maximumf>, %12, %cst_6 [1] : vector<8x8xf32> to vector<8xf32>
    %14 = vector.shape_cast %13 : vector<8xf32> to vector<8x1xf32>
    %15 = vector.broadcast %14 : vector<8x1xf32> to vector<8x8xf32>
    %16 = arith.subf %12, %15 : vector<8x8xf32>
    %17 = math.exp %16 : vector<8x8xf32>
    %cst_7 = arith.constant dense<0.000000e+00> : vector<8xf32>
    %18 = vector.multi_reduction <add>, %17, %cst_7 [1] : vector<8x8xf32> to vector<8xf32>
    %19 = vector.shape_cast %18 : vector<8xf32> to vector<8x1xf32>
    %20 = tpu.reciprocal %19 {approx = true} : vector<8x1xf32> -> vector<8x1xf32>
    %21 = vector.broadcast %20 : vector<8x1xf32> to vector<8x8xf32>
    %22 = arith.mulf %17, %21 : vector<8x8xf32>
    %cst_8 = arith.constant dense<0.000000e+00> : vector<8x16xf32>
    %23 = tpu.matmul %22, %11, %cst_8 {dimension_numbers = #tpu.dot_dimension_numbers<[1], [0], [0], [1], [0, 0, 1, 1], [], []>} : vector<8x8xf32>, vector<8x16xf32>, vector<8x16xf32> -> vector<8x16xf32>
    %24 = vector.extract_strided_slice %6 {offsets = [0, 16], sizes = [8, 16], strides = [1, 1]} : vector<8x64xf32> to vector<8x16xf32>
    %25 = vector.extract_strided_slice %7 {offsets = [0, 16], sizes = [8, 16], strides = [1, 1]} : vector<8x64xf32> to vector<8x16xf32>
    %26 = vector.extract_strided_slice %8 {offsets = [0, 16], sizes = [8, 16], strides = [1, 1]} : vector<8x64xf32> to vector<8x16xf32>
    %cst_9 = arith.constant dense<0.000000e+00> : vector<8x8xf32>
    %27 = tpu.matmul %24, %25, %cst_9 {dimension_numbers = #tpu.dot_dimension_numbers<[1], [1], [0], [0], [0, 0, 1, 0], [], []>} : vector<8x16xf32>, vector<8x16xf32>, vector<8x8xf32> -> vector<8x8xf32>
    %cst_10 = arith.constant dense<0xFF800000> : vector<8xf32>
    %28 = vector.multi_reduction <maximumf>, %27, %cst_10 [1] : vector<8x8xf32> to vector<8xf32>
    %29 = vector.shape_cast %28 : vector<8xf32> to vector<8x1xf32>
    %30 = vector.broadcast %29 : vector<8x1xf32> to vector<8x8xf32>
    %31 = arith.subf %27, %30 : vector<8x8xf32>
    %32 = math.exp %31 : vector<8x8xf32>
    %cst_11 = arith.constant dense<0.000000e+00> : vector<8xf32>
    %33 = vector.multi_reduction <add>, %32, %cst_11 [1] : vector<8x8xf32> to vector<8xf32>
    %34 = vector.shape_cast %33 : vector<8xf32> to vector<8x1xf32>
    %35 = tpu.reciprocal %34 {approx = true} : vector<8x1xf32> -> vector<8x1xf32>
    %36 = vector.broadcast %35 : vector<8x1xf32> to vector<8x8xf32>
    %37 = arith.mulf %32, %36 : vector<8x8xf32>
    %cst_12 = arith.constant dense<0.000000e+00> : vector<8x16xf32>
    %38 = tpu.matmul %37, %26, %cst_12 {dimension_numbers = #tpu.dot_dimension_numbers<[1], [0], [0], [1], [0, 0, 1, 1], [], []>} : vector<8x8xf32>, vector<8x16xf32>, vector<8x16xf32> -> vector<8x16xf32>
    %39 = vector.extract_strided_slice %6 {offsets = [0, 32], sizes = [8, 16], strides = [1, 1]} : vector<8x64xf32> to vector<8x16xf32>
    %40 = vector.extract_strided_slice %7 {offsets = [0, 32], sizes = [8, 16], strides = [1, 1]} : vector<8x64xf32> to vector<8x16xf32>
    %41 = vector.extract_strided_slice %8 {offsets = [0, 32], sizes = [8, 16], strides = [1, 1]} : vector<8x64xf32> to vector<8x16xf32>
    %cst_13 = arith.constant dense<0.000000e+00> : vector<8x8xf32>
    %42 = tpu.matmul %39, %40, %cst_13 {dimension_numbers = #tpu.dot_dimension_numbers<[1], [1], [0], [0], [0, 0, 1, 0], [], []>} : vector<8x16xf32>, vector<8x16xf32>, vector<8x8xf32> -> vector<8x8xf32>
    %cst_14 = arith.constant dense<0xFF800000> : vector<8xf32>
    %43 = vector.multi_reduction <maximumf>, %42, %cst_14 [1] : vector<8x8xf32> to vector<8xf32>
    %44 = vector.shape_cast %43 : vector<8xf32> to vector<8x1xf32>
    %45 = vector.broadcast %44 : vector<8x1xf32> to vector<8x8xf32>
    %46 = arith.subf %42, %45 : vector<8x8xf32>
    %47 = math.exp %46 : vector<8x8xf32>
    %cst_15 = arith.constant dense<0.000000e+00> : vector<8xf32>
    %48 = vector.multi_reduction <add>, %47, %cst_15 [1] : vector<8x8xf32> to vector<8xf32>
    %49 = vector.shape_cast %48 : vector<8xf32> to vector<8x1xf32>
    %50 = tpu.reciprocal %49 {approx = true} : vector<8x1xf32> -> vector<8x1xf32>
    %51 = vector.broadcast %50 : vector<8x1xf32> to vector<8x8xf32>
    %52 = arith.mulf %47, %51 : vector<8x8xf32>
    %cst_16 = arith.constant dense<0.000000e+00> : vector<8x16xf32>
    %53 = tpu.matmul %52, %41, %cst_16 {dimension_numbers = #tpu.dot_dimension_numbers<[1], [0], [0], [1], [0, 0, 1, 1], [], []>} : vector<8x8xf32>, vector<8x16xf32>, vector<8x16xf32> -> vector<8x16xf32>
    %54 = vector.extract_strided_slice %6 {offsets = [0, 48], sizes = [8, 16], strides = [1, 1]} : vector<8x64xf32> to vector<8x16xf32>
    %55 = vector.extract_strided_slice %7 {offsets = [0, 48], sizes = [8, 16], strides = [1, 1]} : vector<8x64xf32> to vector<8x16xf32>
    %56 = vector.extract_strided_slice %8 {offsets = [0, 48], sizes = [8, 16], strides = [1, 1]} : vector<8x64xf32> to vector<8x16xf32>
    %cst_17 = arith.constant dense<0.000000e+00> : vector<8x8xf32>
    %57 = tpu.matmul %54, %55, %cst_17 {dimension_numbers = #tpu.dot_dimension_numbers<[1], [1], [0], [0], [0, 0, 1, 0], [], []>} : vector<8x16xf32>, vector<8x16xf32>, vector<8x8xf32> -> vector<8x8xf32>
    %cst_18 = arith.constant dense<0xFF800000> : vector<8xf32>
    %58 = vector.multi_reduction <maximumf>, %57, %cst_18 [1] : vector<8x8xf32> to vector<8xf32>
    %59 = vector.shape_cast %58 : vector<8xf32> to vector<8x1xf32>
    %60 = vector.broadcast %59 : vector<8x1xf32> to vector<8x8xf32>
    %61 = arith.subf %57, %60 : vector<8x8xf32>
    %62 = math.exp %61 : vector<8x8xf32>
    %cst_19 = arith.constant dense<0.000000e+00> : vector<8xf32>
    %63 = vector.multi_reduction <add>, %62, %cst_19 [1] : vector<8x8xf32> to vector<8xf32>
    %64 = vector.shape_cast %63 : vector<8xf32> to vector<8x1xf32>
    %65 = tpu.reciprocal %64 {approx = true} : vector<8x1xf32> -> vector<8x1xf32>
    %66 = vector.broadcast %65 : vector<8x1xf32> to vector<8x8xf32>
    %67 = arith.mulf %62, %66 : vector<8x8xf32>
    %cst_20 = arith.constant dense<0.000000e+00> : vector<8x16xf32>
    %68 = tpu.matmul %67, %56, %cst_20 {dimension_numbers = #tpu.dot_dimension_numbers<[1], [0], [0], [1], [0, 0, 1, 1], [], []>} : vector<8x8xf32>, vector<8x16xf32>, vector<8x16xf32> -> vector<8x16xf32>
    %69 = tpu.concatenate %23, %38, %53, %68 in 1 : vector<8x16xf32>, vector<8x16xf32>, vector<8x16xf32>, vector<8x16xf32> -> vector<8x64xf32>
    %c0_21 = arith.constant 0 : index
    %c0_22 = arith.constant 0 : index
    %70 = vector.load %arg3[%c0_21, %c0_22] : memref<64x32xf32, #tpu.memory_space<vmem>>, vector<64x32xf32>
    %cst_23 = arith.constant dense<0.000000e+00> : vector<8x32xf32>
    %71 = tpu.matmul %69, %70, %cst_23 {dimension_numbers = #tpu.dot_dimension_numbers<[1], [0], [0], [1], [0, 0, 1, 1], [], []>} : vector<8x64xf32>, vector<64x32xf32>, vector<8x32xf32> -> vector<8x32xf32>
    %c0_24 = arith.constant 0 : index
    %c0_25 = arith.constant 0 : index
    %72 = vector.load %arg4[%c0_24, %c0_25] : memref<1x32xf32, #tpu.memory_space<vmem>>, vector<1x32xf32>
    %73 = vector.broadcast %72 : vector<1x32xf32> to vector<8x32xf32>
    %74 = arith.addf %71, %73 : vector<8x32xf32>
    %c0_26 = arith.constant 0 : index
    %c0_27 = arith.constant 0 : index
    %c0_28 = arith.constant 0 : index
    %75 = vector.load %arg5[%c0_26, %c0_27, %c0_28] : memref<1x8x32xf32, #tpu.memory_space<vmem>>, vector<1x8x32xf32>
    %76 = vector.shape_cast %75 : vector<1x8x32xf32> to vector<8x32xf32>
    %77 = vector.shape_cast %74 : vector<8x32xf32> to vector<1x8x32xf32>
    tpu.vector_store %arg5[%c0_26, %c0_27, %c0_28], %77 {strides = array<i32>} : memref<1x8x32xf32, #tpu.memory_space<vmem>>, vector<1x8x32xf32>,
    return
  }
  func.func @transform_0(%arg0: i32) -> (i32, i32, i32) {
    %c0_i32 = arith.constant 0 : i32
    %c0_i32_0 = arith.constant 0 : i32
    %c0_i32_1 = arith.constant 0 : i32
    return %arg0, %c0_i32, %c0_i32_0 : i32, i32, i32
  }
  func.func @transform_1(%arg0: i32) -> (i32, i32) {
    %c0_i32 = arith.constant 0 : i32
    %c0_i32_0 = arith.constant 0 : i32
    %c0_i32_1 = arith.constant 0 : i32
    return %c0_i32, %c0_i32_0 : i32, i32
  }
  func.func @transform_2(%arg0: i32) -> (i32, i32) {
    %c0_i32 = arith.constant 0 : i32
    %c0_i32_0 = arith.constant 0 : i32
    %c0_i32_1 = arith.constant 0 : i32
    return %c0_i32, %c0_i32_0 : i32, i32
  }
  func.func @transform_3(%arg0: i32) -> (i32, i32) {
    %c0_i32 = arith.constant 0 : i32
    %c0_i32_0 = arith.constant 0 : i32
    %c0_i32_1 = arith.constant 0 : i32
    return %c0_i32, %c0_i32_0 : i32, i32
  }
  func.func @transform_4(%arg0: i32) -> (i32, i32, i32) {
    %c0_i32 = arith.constant 0 : i32
    %c0_i32_0 = arith.constant 0 : i32
    %c0_i32_1 = arith.constant 0 : i32
    return %arg0, %c0_i32, %c0_i32_0 : i32, i32, i32
  }
}

</mosaic_0001>

<llo_original>
// kernel: tpu_custom_call.1
$region0: #{tpu_custom_call.1}
  #allocation0 [shape = 'u32[]', space=smem, size = 0x4, offset = 0x4, fixed_abs, tag = 'smem constant byte address 0x4 - core index']
  #allocation1 [shape = 'u32[144,128]{1,0:T(1,128)}', space=vmem, size = 0x12000, scoped, tag = 'internal scratch']
  %s0 = inlined_call_operand.vmem [shape: f32[2,8,32], index: 0, kind: input, shape index: {}]
  %s1 = inlined_call_operand.vmem [shape: f32[32,192], index: 1, kind: input, shape index: {}]
  %s2 = inlined_call_operand.vmem [shape: f32[64,32], index: 2, kind: input, shape index: {}]
  %s3 = inlined_call_operand.vmem [shape: f32[1,32], index: 3, kind: input, shape index: {}]
  %s4 = inlined_call_operand.hbm [shape: f32[2,8,32], index: 4, kind: output, shape index: {}]
  %s5 = sld [smem:[#allocation0]]
  $region49: #{tpu_custom_call.1} parent=0
    _
  %s7 = ssub.s32 1, %s5
  %s8 = scalar_select 0, %s7, %s5
  $region1: #{tpu_custom_call.1} parent=0
    #allocation2 [shape = 'u8[8192]{0}', space=vmem, size = 0x2000, scoped, tag = 'output window, operand 0']
    #allocation3 [shape = 's32[2]{0}', space=sflag, size = 0x8, scoped, tag = 'scoped memory for tpu_custom_call.1']
    %9 = vsyncpa [#allocation3], 0
    %s10 = scalar_lea.sflag [#allocation3], 1
    %11 = vsyncpa %s10, 0
    loop: start=0, step=1, limit=4
    $region2: #{tpu_custom_call.1} parent=1 // loop_pre_header
      _
    $region3: #{tpu_custom_call.1} parent=1 // loop_header
      %s13 = sphi 0, %s17
      %p14 = scmp.ge.s32.totalorder %s13, 4
      %s23 = sphi 0, %s25
      %s26 = sphi 0, %s23
      %s27 = sphi 0, %s26
      %s43 = sphi 0, %s27
      %s47 = sphi 0, %s47
      %s49 = sphi 0, %s47
      %s50 = sphi 0, %s49
      %s64 = sphi 0, %s50
      %s68 = sphi 0, %s68
      %s70 = sphi 0, %s68
      %s71 = sphi 0, %s70
      %s85 = sphi 0, %s71
      %s89 = sphi 0, %s89
      %s91 = sphi 0, %s89
      %s92 = sphi 0, %s91
      %s106 = sphi 0, %s92
      %s112 = sphi 0, %s114
      %s115 = sphi 0, %s112
      %s116 = sphi 0, %s115
      %s132 = sphi 0, %s116
    $region4: #{tpu_custom_call.1} parent=1 // loop_header_branch
      %16 = sbr.rel (%p14) target = $region8
    $region5: #{tpu_custom_call.1} parent=1 // loop_body
      %s18 = ssub.s32 %s13, 1
      %s19 = ssub.s32 %s13, 2
      %s20 = sadd.s32 %s13, 1
      %s21 = ssub.s32 %s13, %s20
      %p22 = scmp.eq.s32.totalorder %s21, 0
      %s24 = sadd.s32 %s23, 1
      %s25 = scalar_select %p22, %s23, %s24
      %p28 = pneg %p22
      %p29 = scmp.eq.s32.totalorder %s13, 1
      %p30 = por %p28, %p29
      %p31 = scmp.ne.s32.totalorder %s23, %s26
      %p32 = scmp.eq.s32.totalorder %s13, 0
      %p33 = por %p31, %p32
      %p34 = scmp.ne.s32.totalorder %s23, %s26
      %p35 = scmp.eq.s32.totalorder %s18, 1
      %p36 = por %p34, %p35
      %p37 = scmp.ne.s32.totalorder %s26, %s27
      %p38 = scmp.eq.s32.totalorder %s18, 0
      %p39 = por %p37, %p38
      %p40 = scmp.ne.s32.totalorder %s26, %s27
      %p41 = scmp.eq.s32.totalorder %s19, 1
      %p42 = por %p40, %p41
      %p44 = scmp.ne.s32.totalorder %s27, %s43
      %p45 = scmp.eq.s32.totalorder %s19, 0
      %p46 = por %p44, %p45
      %s48 = sadd.s32 %s47, 1
      %p51 = scmp.eq.s32.totalorder %s13, 1
      %p52 = scmp.ne.s32.totalorder %s47, %s49
      %p53 = scmp.eq.s32.totalorder %s13, 0
      %p54 = por %p52, %p53
      %p55 = scmp.ne.s32.totalorder %s47, %s49
      %p56 = scmp.eq.s32.totalorder %s18, 1
      %p57 = por %p55, %p56
      %p58 = scmp.ne.s32.totalorder %s49, %s50
      %p59 = scmp.eq.s32.totalorder %s18, 0
      %p60 = por %p58, %p59
      %p61 = scmp.ne.s32.totalorder %s49, %s50
      %p62 = scmp.eq.s32.totalorder %s19, 1
      %p63 = por %p61, %p62
      %p65 = scmp.ne.s32.totalorder %s50, %s64
      %p66 = scmp.eq.s32.totalorder %s19, 0
      %p67 = por %p65, %p66
      %s69 = sadd.s32 %s68, 1
      %p72 = scmp.eq.s32.totalorder %s13, 1
      %p73 = scmp.ne.s32.totalorder %s68, %s70
      %p74 = scmp.eq.s32.totalorder %s13, 0
      %p75 = por %p73, %p74
      %p76 = scmp.ne.s32.totalorder %s68, %s70
      %p77 = scmp.eq.s32.totalorder %s18, 1
      %p78 = por %p76, %p77
      %p79 = scmp.ne.s32.totalorder %s70, %s71
      %p80 = scmp.eq.s32.totalorder %s18, 0
      %p81 = por %p79, %p80
      %p82 = scmp.ne.s32.totalorder %s70, %s71
      %p83 = scmp.eq.s32.totalorder %s19, 1
      %p84 = por %p82, %p83
      %p86 = scmp.ne.s32.totalorder %s71, %s85
      %p87 = scmp.eq.s32.totalorder %s19, 0
      %p88 = por %p86, %p87
      %s90 = sadd.s32 %s89, 1
      %p93 = scmp.eq.s32.totalorder %s13, 1
      %p94 = scmp.ne.s32.totalorder %s89, %s91
      %p95 = scmp.eq.s32.totalorder %s13, 0
      %p96 = por %p94, %p95
      %p97 = scmp.ne.s32.totalorder %s89, %s91
      %p98 = scmp.eq.s32.totalorder %s18, 1
      %p99 = por %p97, %p98
      %p100 = scmp.ne.s32.totalorder %s91, %s92
      %p101 = scmp.eq.s32.totalorder %s18, 0
      %p102 = por %p100, %p101
      %p103 = scmp.ne.s32.totalorder %s91, %s92
      %p104 = scmp.eq.s32.totalorder %s19, 1
      %p105 = por %p103, %p104
      %p107 = scmp.ne.s32.totalorder %s92, %s106
      %p108 = scmp.eq.s32.totalorder %s19, 0
      %p109 = por %p107, %p108
      %s110 = ssub.s32 %s13, %s20
      %p111 = scmp.eq.s32.totalorder %s110, 0
      %s113 = sadd.s32 %s112, 1
      %s114 = scalar_select %p111, %s112, %s113
      %p117 = pneg %p111
      %p118 = scmp.eq.s32.totalorder %s13, 1
      %p119 = por %p117, %p118
      %p120 = scmp.ne.s32.totalorder %s112, %s115
      %p121 = scmp.eq.s32.totalorder %s13, 0
      %p122 = por %p120, %p121
      %p123 = scmp.ne.s32.totalorder %s112, %s115
      %p124 = scmp.eq.s32.totalorder %s18, 1
      %p125 = por %p123, %p124
      %p126 = scmp.ne.s32.totalorder %s115, %s116
      %p127 = scmp.eq.s32.totalorder %s18, 0
      %p128 = por %p126, %p127
      %p129 = scmp.ne.s32.totalorder %s115, %s116
      %p130 = scmp.eq.s32.totalorder %s19, 1
      %p131 = por %p129, %p130
      %p133 = scmp.ne.s32.totalorder %s116, %s132
      %p134 = scmp.eq.s32.totalorder %s19, 0
      %p135 = por %p133, %p134
      %p136 = scmp.le.s32.totalorder 1, %s13
      %p137 = scmp.lt.s32.totalorder %s13, 3
      %p138 = pnand %p136, %p137
      %p139 = pneg %p138
      // Predicated region
      $region9: #{tpu_custom_call.1} parent=5 // pred_check
        _
      $region10: #{tpu_custom_call.1} parent=5 // pred_check_branch
        %141 = sbr.rel (%p138) target = $region12
      $region11: #{tpu_custom_call.1} parent=5 // pred_region
        %s142 = ssub.s32 %s13, 1
        // Predicated region
        $region13: #{tpu_custom_call.1} parent=11 // pred_check
          %p143 = pneg %p60
        $region14: #{tpu_custom_call.1} parent=11 // pred_check_branch
          %145 = sbr.rel (%p143) target = $region16
        $region15: #{tpu_custom_call.1} parent=11 // pred_region
          _
        $region16: #{tpu_custom_call.1} parent=11 // pred_fallthru
          _
        // Predicated region
        $region17: #{tpu_custom_call.1} parent=11 // pred_check
          %p146 = pneg %p81
        $region18: #{tpu_custom_call.1} parent=11 // pred_check_branch
          %148 = sbr.rel (%p146) target = $region20
        $region19: #{tpu_custom_call.1} parent=11 // pred_region
          _
        $region20: #{tpu_custom_call.1} parent=11 // pred_fallthru
          _
        // Predicated region
        $region21: #{tpu_custom_call.1} parent=11 // pred_check
          %p149 = pneg %p102
        $region22: #{tpu_custom_call.1} parent=11 // pred_check_branch
          %151 = sbr.rel (%p149) target = $region24
        $region23: #{tpu_custom_call.1} parent=11 // pred_region
          _
        $region24: #{tpu_custom_call.1} parent=11 // pred_fallthru
          _
      $region12: #{tpu_custom_call.1} parent=5 // pred_fallthru
        _
      %p152 = scmp.lt.s32.totalorder %s13, 2
      // Predicated region
      $region25: #{tpu_custom_call.1} parent=5 // pred_check
        %p153 = pneg %p152
      $region26: #{tpu_custom_call.1} parent=5 // pred_check_branch
        %155 = sbr.rel (%p153) target = $region28
      $region27: #{tpu_custom_call.1} parent=5 // pred_region
        // Predicated region
        $region29: #{tpu_custom_call.1} parent=27 // pred_check
          %p156 = pneg %p33
        $region30: #{tpu_custom_call.1} parent=27 // pred_check_branch
          %158 = sbr.rel (%p156) target = $region32
        $region31: #{tpu_custom_call.1} parent=27 // pred_region
          %p159 = scmp.lt.s32.totalorder %s13, 1
          %s160 = scalar_select %p159, %s13, 1
          %s161 = smul.addr %s160, 8
          %s162 = scalar_lea.vmem %s0, %s161
        $region32: #{tpu_custom_call.1} parent=27 // pred_fallthru
          _
      $region28: #{tpu_custom_call.1} parent=5 // pred_fallthru
        _
      %p163 = scmp.le.s32.totalorder 1, %s13
      %p164 = scmp.lt.s32.totalorder %s13, 3
      %p165 = pnand %p163, %p164
      %p166 = pneg %p165
      // Predicated region
      $region33: #{tpu_custom_call.1} parent=5 // pred_check
        _
      $region34: #{tpu_custom_call.1} parent=5 // pred_check_branch
        %168 = sbr.rel (%p165) target = $region36
      $region35: #{tpu_custom_call.1} parent=5 // pred_region
        %s169 = ssub.s32 %s13, 1
        %p170 = scmp.lt.s32.totalorder %s18, 1
        %s171 = scalar_select %p170, %s18, 1
        %s172 = smul.addr %s171, 8
        %s173 = scalar_lea.vmem %s0, %s172
        %p174 = pneg %p39
        %p175 = pneg %p36
        %p176 = pneg %p60
        %p177 = pneg %p57
        %p178 = pneg %p81
        %p179 = pneg %p78
        %p180 = pneg %p102
        %p181 = pneg %p99
        %p182 = pneg %p128
        %p183 = pneg %p125
        %s184 = sand.u32 %s115, 1
        %s185 = scalar_lea.sflag [#allocation3], %s184
        %s186 = sand.u32 %s115, 1
        %s187 = smul.addr %s186, 8
        %s188 = scalar_lea.vmem [#allocation2], %s187
        %p189 = scmp.lt.s32.totalorder %s18, 1
        %s190 = scalar_select %p189, %s18, 1
        %s191 = smul.addr %s190, 8
        %s192 = scalar_lea.vmem %s0, %s191
        %v193 = vld [vmem:[%s192] sm:$0xff]
        %v194 = vld [vmem:[%s1] sm:$0xff]
        %v195 = vld [vmem:[%s1 + $0x8] sm:$0xff]
        %v196 = vld [vmem:[%s1 + $0x10] sm:$0xff]
        %v197 = vld [vmem:[%s1 + $0x18] sm:$0xff]
        %v198 = vld [vmem:[%s1 + $0x20] sm:$0xff]
        %v199 = vld [vmem:[%s1 + $0x28] sm:$0xff]
        %v200 = vld [vmem:[%s1 + $0x30] sm:$0xff]
        %v201 = vld [vmem:[%s1 + $0x38] sm:$0xff]
        %vm202 = vcmask 261120
        %v204 = vsel %vm202, %v193, 0
        %206 = vmatprep.subr.mxu0 %v195
        %207 = vmatpush1.msra.mxu0 %v194
        %208 = vmatprep.subr.mxu0 %v197
        %209 = vmatpush1.msra.mxu0 %v196
        %210 = vmatprep.subr.mxu0 %v199
        %211 = vmatpush1.msra.mxu0 %v198
        %212 = vmatprep.subr.mxu0 %v201
        %213 = vmatpush1.msra.mxu0 %v200
        %214 = vmatprep.subr.mxu0 0.0
        %215 = vmatpush1.msra.mxu0 0.0
        %216 = vmatprep.subr.mxu0 0.0
        %217 = vmatpush1.msra.mxu0 0.0
        %218 = vmatprep.subr.mxu0 0.0
        %219 = vmatpush1.msra.mxu0 0.0
        %220 = vmatprep.subr.mxu0 0.0
        %221 = vmatpush1.msra.mxu0 0.0
        %222 = vmatprep.subr.mxu0 0.0
        %223 = vmatpush1.msra.mxu0 0.0
        %224 = vmatprep.subr.mxu0 0.0
        %225 = vmatpush1.msra.mxu0 0.0
        %226 = vmatprep.subr.mxu0 0.0
        %227 = vmatpush1.msra.mxu0 0.0
        %228 = vmatprep.subr.mxu0 0.0
        %229 = vmatpush1.msra.mxu0 0.0
        %230 = vmatprep.subr.mxu0 0.0
        %231 = vmatpush1.msra.mxu0 0.0
        %232 = vmatprep.subr.mxu0 0.0
        %233 = vmatpush1.msra.mxu0 0.0
        %234 = vmatprep.subr.mxu0 0.0
        %235 = vmatpush1.msra.mxu0 0.0
        %236 = vmatprep.subr.mxu0 0.0
        %237 = vmatpush1.msra.mxu0 0.0
        %238 = vmatprep.subr.mxu0 0.0
        %239 = vmatpush1.msra.mxu0 0.0
        %240 = vmatprep.subr.mxu0 0.0
        %241 = vmatpush1.msra.mxu0 0.0
        %242 = vmatprep.subr.mxu0 0.0
        %243 = vmatpush1.msra.mxu0 0.0
        %244 = vmatprep.subr.mxu0 0.0
        %245 = vmatpush1.msra.mxu0 0.0
        %246 = vmatprep.subr.mxu0 0.0
        %247 = vmatpush1.msra.mxu0 0.0
        %248 = vmatprep.subr.mxu0 0.0
        %249 = vmatpush1.msra.mxu0 0.0
        %250 = vmatprep.subr.mxu0 0.0
        %251 = vmatpush1.msra.mxu0 0.0
        %252 = vmatprep.subr.mxu0 0.0
        %253 = vmatpush1.msra.mxu0 0.0
        %254 = vmatprep.subr.mxu0 0.0
        %255 = vmatpush1.msra.mxu0 0.0
        %256 = vmatprep.subr.mxu0 0.0
        %257 = vmatpush1.msra.mxu0 0.0
        %258 = vmatprep.subr.mxu0 0.0
        %259 = vmatpush1.msra.mxu0 0.0
        %260 = vmatprep.subr.mxu0 0.0
        %261 = vmatpush1.msra.mxu0 0.0
        %262 = vmatprep.subr.mxu0 0.0
        %263 = vmatpush1.msra.mxu0 0.0
        %264 = vmatprep.subr.mxu0 0.0
        %265 = vmatpush1.msra.mxu0 0.0
        %266 = vmatprep.subr.mxu0 0.0
        %267 = vmatpush1.msra.mxu0 0.0
        %268 = vmatprep.subr.mxu0 0.0
        %269 = vmatpush1.msra.mxu0 0.0
        %270 = vmatprep.mubr.f32.mxu0 0.0
        %271 = vmatmul.mubr.f32.gmra.mrb[0].mxu0 %v204
        %v272 = vpop.f32.mrb[0].mxu0
        %v273 = vadd.f32 0.0, %v272
        %v274 = vpop.f32.mrb[0].mxu0
        %v275 = vadd.f32 0.0, %v274
        %276 = vdwg.mxu0
        %v277 = vmul.f32 %v273, 0.25
        %279 = vrot.lane.b32.xlu0 %v273, 64
        %v280 = vpop.permute.xlu0 %279
        %vm281 = vcmask 130048
        %v283 = vsel %vm281, %v277, 0
        %v285 = vsel %vm281, %v280, 0
        %287 = vmatprep.subr.mxu0 0.0
        %288 = vmatpush1.xpose.msra.mxu0 %v285
        %289 = vmatprep.subr.mxu0 0.0
        %290 = vmatpush1.xpose.msra.mxu0 0.0
        %291 = vmatprep.subr.mxu0 0.0
        %292 = vmatpush1.xpose.msra.mxu0 0.0
        %293 = vmatprep.subr.mxu0 0.0
        %294 = vmatpush1.xpose.msra.mxu0 0.0
        %295 = vmatprep.subr.mxu0 0.0
        %296 = vmatpush1.xpose.msra.mxu0 0.0
        %297 = vmatprep.subr.mxu0 0.0
        %298 = vmatpush1.xpose.msra.mxu0 0.0
        %299 = vmatprep.subr.mxu0 0.0
        %300 = vmatpush1.xpose.msra.mxu0 0.0
        %301 = vmatprep.subr.mxu0 0.0
        %302 = vmatpush1.xpose.msra.mxu0 0.0
        %303 = vmatprep.subr.mxu0 0.0
        %304 = vmatpush1.xpose.msra.mxu0 0.0
        %305 = vmatprep.subr.mxu0 0.0
        %306 = vmatpush1.xpose.msra.mxu0 0.0
        %307 = vmatprep.subr.mxu0 0.0
        %308 = vmatpush1.xpose.msra.mxu0 0.0
        %309 = vmatprep.subr.mxu0 0.0
        %310 = vmatpush1.xpose.msra.mxu0 0.0
        %311 = vmatprep.subr.mxu0 0.0
        %312 = vmatpush1.xpose.msra.mxu0 0.0
        %313 = vmatprep.subr.mxu0 0.0
        %314 = vmatpush1.xpose.msra.mxu0 0.0
        %315 = vmatprep.subr.mxu0 0.0
        %316 = vmatpush1.xpose.msra.mxu0 0.0
        %317 = vmatprep.subr.mxu0 0.0
        %318 = vmatpush1.xpose.msra.mxu0 0.0
        %319 = vmatprep.subr.mxu0 0.0
        %320 = vmatpush1.xpose.msra.mxu0 0.0
        %321 = vmatprep.subr.mxu0 0.0
        %322 = vmatpush1.xpose.msra.mxu0 0.0
        %323 = vmatprep.subr.mxu0 0.0
        %324 = vmatpush1.xpose.msra.mxu0 0.0
        %325 = vmatprep.subr.mxu0 0.0
        %326 = vmatpush1.xpose.msra.mxu0 0.0
        %327 = vmatprep.subr.mxu0 0.0
        %328 = vmatpush1.xpose.msra.mxu0 0.0
        %329 = vmatprep.subr.mxu0 0.0
        %330 = vmatpush1.xpose.msra.mxu0 0.0
        %331 = vmatprep.subr.mxu0 0.0
        %332 = vmatpush1.xpose.msra.mxu0 0.0
        %333 = vmatprep.subr.mxu0 0.0
        %334 = vmatpush1.xpose.msra.mxu0 0.0
        %335 = vmatprep.subr.mxu0 0.0
        %336 = vmatpush1.xpose.msra.mxu0 0.0
        %337 = vmatprep.subr.mxu0 0.0
        %338 = vmatpush1.xpose.msra.mxu0 0.0
        %339 = vmatprep.subr.mxu0 0.0
        %340 = vmatpush1.xpose.msra.mxu0 0.0
        %341 = vmatprep.subr.mxu0 0.0
        %342 = vmatpush1.xpose.msra.mxu0 0.0
        %343 = vmatprep.subr.mxu0 0.0
        %344 = vmatpush1.xpose.msra.mxu0 0.0
        %345 = vmatprep.subr.mxu0 0.0
        %346 = vmatpush1.xpose.msra.mxu0 0.0
        %347 = vmatprep.subr.mxu0 0.0
        %348 = vmatpush1.xpose.msra.mxu0 0.0
        %349 = vmatprep.subr.mxu0 0.0
        %350 = vmatpush1.xpose.msra.mxu0 0.0
        %351 = vmatprep.mubr.f32.mxu0 0.0
        %352 = vmatmul.mubr.f32.gmra.mrb[0].mxu0 %v283
        %v353 = vpop.f32.mrb[0].mxu0
        %v354 = vadd.f32 0.0, %v353
        %v355 = vpop.f32.mrb[0].mxu0
        %356 = vdwg.mxu0
        %vm357 = vcmask 64512
        %v358 = vsel %vm357, %v354, -inf
        %359 = vmax.xlane.f32.xlu0 %v358
        %v360 = vpop.xlane.xlu0 %359
        %v361 = vsub.f32 %v354, %v360
        %v362 = vmul.f32 %v361, 1.442695
        %v363 = vpow.pop %v362
        %v364 = vsel %vm357, %v363, 0.0
        %365 = vadd.xlane.f32.xlu0 %v364
        %v366 = vpop.xlane.xlu0 %365
        %v367 = vrcp.pop %v366
        %v368 = vmul.f32 %v363, %v367
        %v370 = vsel %vm357, %v368, 0
        %372 = vmatprep.subr.mxu0 0.0
        %373 = vmatpush1.msra.mxu0 %v275
        %374 = vmatprep.subr.mxu0 0.0
        %375 = vmatpush1.msra.mxu0 0.0
        %376 = vmatprep.subr.mxu0 0.0
        %377 = vmatpush1.msra.mxu0 0.0
        %378 = vmatprep.subr.mxu0 0.0
        %379 = vmatpush1.msra.mxu0 0.0
        %380 = vmatprep.subr.mxu0 0.0
        %381 = vmatpush1.msra.mxu0 0.0
        %382 = vmatprep.subr.mxu0 0.0
        %383 = vmatpush1.msra.mxu0 0.0
        %384 = vmatprep.subr.mxu0 0.0
        %385 = vmatpush1.msra.mxu0 0.0
        %386 = vmatprep.subr.mxu0 0.0
        %387 = vmatpush1.msra.mxu0 0.0
        %388 = vmatprep.subr.mxu0 0.0
        %389 = vmatpush1.msra.mxu0 0.0
        %390 = vmatprep.subr.mxu0 0.0
        %391 = vmatpush1.msra.mxu0 0.0
        %392 = vmatprep.subr.mxu0 0.0
        %393 = vmatpush1.msra.mxu0 0.0
        %394 = vmatprep.subr.mxu0 0.0
        %395 = vmatpush1.msra.mxu0 0.0
        %396 = vmatprep.subr.mxu0 0.0
        %397 = vmatpush1.msra.mxu0 0.0
        %398 = vmatprep.subr.mxu0 0.0
        %399 = vmatpush1.msra.mxu0 0.0
        %400 = vmatprep.subr.mxu0 0.0
        %401 = vmatpush1.msra.mxu0 0.0
        %402 = vmatprep.subr.mxu0 0.0
        %403 = vmatpush1.msra.mxu0 0.0
        %404 = vmatprep.subr.mxu0 0.0
        %405 = vmatpush1.msra.mxu0 0.0
        %406 = vmatprep.subr.mxu0 0.0
        %407 = vmatpush1.msra.mxu0 0.0
        %408 = vmatprep.subr.mxu0 0.0
        %409 = vmatpush1.msra.mxu0 0.0
        %410 = vmatprep.subr.mxu0 0.0
        %411 = vmatpush1.msra.mxu0 0.0
        %412 = vmatprep.subr.mxu0 0.0
        %413 = vmatpush1.msra.mxu0 0.0
        %414 = vmatprep.subr.mxu0 0.0
        %415 = vmatpush1.msra.mxu0 0.0
        %416 = vmatprep.subr.mxu0 0.0
        %417 = vmatpush1.msra.mxu0 0.0
        %418 = vmatprep.subr.mxu0 0.0
        %419 = vmatpush1.msra.mxu0 0.0
        %420 = vmatprep.subr.mxu0 0.0
        %421 = vmatpush1.msra.mxu0 0.0
        %422 = vmatprep.subr.mxu0 0.0
        %423 = vmatpush1.msra.mxu0 0.0
        %424 = vmatprep.subr.mxu0 0.0
        %425 = vmatpush1.msra.mxu0 0.0
        %426 = vmatprep.subr.mxu0 0.0
        %427 = vmatpush1.msra.mxu0 0.0
        %428 = vmatprep.subr.mxu0 0.0
        %429 = vmatpush1.msra.mxu0 0.0
        %430 = vmatprep.subr.mxu0 0.0
        %431 = vmatpush1.msra.mxu0 0.0
        %432 = vmatprep.subr.mxu0 0.0
        %433 = vmatpush1.msra.mxu0 0.0
        %434 = vmatprep.subr.mxu0 0.0
        %435 = vmatpush1.msra.mxu0 0.0
        %436 = vmatprep.mubr.f32.mxu0 0.0
        %437 = vmatmul.mubr.f32.gmra.mrb[0].mxu0 %v370
        %v438 = vpop.f32.mrb[0].mxu0
        %v439 = vadd.f32 0.0, %v438
        %v440 = vpop.f32.mrb[0].mxu0
        %441 = vdwg.mxu0
        %442 = vrot.lane.b32.xlu0 %v277, 112
        %v443 = vpop.permute.xlu0 %442
        %444 = vrot.lane.b32.xlu0 %v273, 48
        %v445 = vpop.permute.xlu0 %444
        %v446 = vsel %vm281, %v443, 0
        %v448 = vsel %vm281, %v445, 0
        %450 = vmatprep.subr.mxu0 0.0
        %451 = vmatpush1.xpose.msra.mxu0 %v448
        %452 = vmatprep.subr.mxu0 0.0
        %453 = vmatpush1.xpose.msra.mxu0 0.0
        %454 = vmatprep.subr.mxu0 0.0
        %455 = vmatpush1.xpose.msra.mxu0 0.0
        %456 = vmatprep.subr.mxu0 0.0
        %457 = vmatpush1.xpose.msra.mxu0 0.0
        %458 = vmatprep.subr.mxu0 0.0
        %459 = vmatpush1.xpose.msra.mxu0 0.0
        %460 = vmatprep.subr.mxu0 0.0
        %461 = vmatpush1.xpose.msra.mxu0 0.0
        %462 = vmatprep.subr.mxu0 0.0
        %463 = vmatpush1.xpose.msra.mxu0 0.0
        %464 = vmatprep.subr.mxu0 0.0
        %465 = vmatpush1.xpose.msra.mxu0 0.0
        %466 = vmatprep.subr.mxu0 0.0
        %467 = vmatpush1.xpose.msra.mxu0 0.0
        %468 = vmatprep.subr.mxu0 0.0
        %469 = vmatpush1.xpose.msra.mxu0 0.0
        %470 = vmatprep.subr.mxu0 0.0
        %471 = vmatpush1.xpose.msra.mxu0 0.0
        %472 = vmatprep.subr.mxu0 0.0
        %473 = vmatpush1.xpose.msra.mxu0 0.0
        %474 = vmatprep.subr.mxu0 0.0
        %475 = vmatpush1.xpose.msra.mxu0 0.0
        %476 = vmatprep.subr.mxu0 0.0
        %477 = vmatpush1.xpose.msra.mxu0 0.0
        %478 = vmatprep.subr.mxu0 0.0
        %479 = vmatpush1.xpose.msra.mxu0 0.0
        %480 = vmatprep.subr.mxu0 0.0
        %481 = vmatpush1.xpose.msra.mxu0 0.0
        %482 = vmatprep.subr.mxu0 0.0
        %483 = vmatpush1.xpose.msra.mxu0 0.0
        %484 = vmatprep.subr.mxu0 0.0
        %485 = vmatpush1.xpose.msra.mxu0 0.0
        %486 = vmatprep.subr.mxu0 0.0
        %487 = vmatpush1.xpose.msra.mxu0 0.0
        %488 = vmatprep.subr.mxu0 0.0
        %489 = vmatpush1.xpose.msra.mxu0 0.0
        %490 = vmatprep.subr.mxu0 0.0
        %491 = vmatpush1.xpose.msra.mxu0 0.0
        %492 = vmatprep.subr.mxu0 0.0
        %493 = vmatpush1.xpose.msra.mxu0 0.0
        %494 = vmatprep.subr.mxu0 0.0
        %495 = vmatpush1.xpose.msra.mxu0 0.0
        %496 = vmatprep.subr.mxu0 0.0
        %497 = vmatpush1.xpose.msra.mxu0 0.0
        %498 = vmatprep.subr.mxu0 0.0
        %499 = vmatpush1.xpose.msra.mxu0 0.0
        %500 = vmatprep.subr.mxu0 0.0
        %501 = vmatpush1.xpose.msra.mxu0 0.0
        %502 = vmatprep.subr.mxu0 0.0
        %503 = vmatpush1.xpose.msra.mxu0 0.0
        %504 = vmatprep.subr.mxu0 0.0
        %505 = vmatpush1.xpose.msra.mxu0 0.0
        %506 = vmatprep.subr.mxu0 0.0
        %507 = vmatpush1.xpose.msra.mxu0 0.0
        %508 = vmatprep.subr.mxu0 0.0
        %509 = vmatpush1.xpose.msra.mxu0 0.0
        %510 = vmatprep.subr.mxu0 0.0
        %511 = vmatpush1.xpose.msra.mxu0 0.0
        %512 = vmatprep.subr.mxu0 0.0
        %513 = vmatpush1.xpose.msra.mxu0 0.0
        %514 = vmatprep.mubr.f32.mxu0 0.0
        %515 = vmatmul.mubr.f32.gmra.mrb[0].mxu0 %v446
        %v516 = vpop.f32.mrb[0].mxu0
        %v517 = vadd.f32 0.0, %v516
        %v518 = vpop.f32.mrb[0].mxu0
        %519 = vdwg.mxu0
        %v520 = vsel %vm357, %v517, -inf
        %521 = vmax.xlane.f32.xlu0 %v520
        %v522 = vpop.xlane.xlu0 %521
        %v523 = vsub.f32 %v517, %v522
        %v524 = vmul.f32 %v523, 1.442695
        %v525 = vpow.pop %v524
        %v526 = vsel %vm357, %v525, 0.0
        %527 = vadd.xlane.f32.xlu0 %v526
        %v528 = vpop.xlane.xlu0 %527
        %v529 = vrcp.pop %v528
        %v530 = vmul.f32 %v525, %v529
        %532 = vrot.lane.b32.xlu0 %v275, 112
        %v533 = vpop.permute.xlu0 %532
        %v536 = vsel %vm357, %v530, 0
        %538 = vmatprep.subr.mxu0 0.0
        %539 = vmatpush1.msra.mxu0 %v533
        %540 = vmatprep.subr.mxu0 0.0
        %541 = vmatpush1.msra.mxu0 0.0
        %542 = vmatprep.subr.mxu0 0.0
        %543 = vmatpush1.msra.mxu0 0.0
        %544 = vmatprep.subr.mxu0 0.0
        %545 = vmatpush1.msra.mxu0 0.0
        %546 = vmatprep.subr.mxu0 0.0
        %547 = vmatpush1.msra.mxu0 0.0
        %548 = vmatprep.subr.mxu0 0.0
        %549 = vmatpush1.msra.mxu0 0.0
        %550 = vmatprep.subr.mxu0 0.0
        %551 = vmatpush1.msra.mxu0 0.0
        %552 = vmatprep.subr.mxu0 0.0
        %553 = vmatpush1.msra.mxu0 0.0
        %554 = vmatprep.subr.mxu0 0.0
        %555 = vmatpush1.msra.mxu0 0.0
        %556 = vmatprep.subr.mxu0 0.0
        %557 = vmatpush1.msra.mxu0 0.0
        %558 = vmatprep.subr.mxu0 0.0
        %559 = vmatpush1.msra.mxu0 0.0
        %560 = vmatprep.subr.mxu0 0.0
        %561 = vmatpush1.msra.mxu0 0.0
        %562 = vmatprep.subr.mxu0 0.0
        %563 = vmatpush1.msra.mxu0 0.0
        %564 = vmatprep.subr.mxu0 0.0
        %565 = vmatpush1.msra.mxu0 0.0
        %566 = vmatprep.subr.mxu0 0.0
        %567 = vmatpush1.msra.mxu0 0.0
        %568 = vmatprep.subr.mxu0 0.0
        %569 = vmatpush1.msra.mxu0 0.0
        %570 = vmatprep.subr.mxu0 0.0
        %571 = vmatpush1.msra.mxu0 0.0
        %572 = vmatprep.subr.mxu0 0.0
        %573 = vmatpush1.msra.mxu0 0.0
        %574 = vmatprep.subr.mxu0 0.0
        %575 = vmatpush1.msra.mxu0 0.0
        %576 = vmatprep.subr.mxu0 0.0
        %577 = vmatpush1.msra.mxu0 0.0
        %578 = vmatprep.subr.mxu0 0.0
        %579 = vmatpush1.msra.mxu0 0.0
        %580 = vmatprep.subr.mxu0 0.0
        %581 = vmatpush1.msra.mxu0 0.0
        %582 = vmatprep.subr.mxu0 0.0
        %583 = vmatpush1.msra.mxu0 0.0
        %584 = vmatprep.subr.mxu0 0.0
        %585 = vmatpush1.msra.mxu0 0.0
        %586 = vmatprep.subr.mxu0 0.0
        %587 = vmatpush1.msra.mxu0 0.0
        %588 = vmatprep.subr.mxu0 0.0
        %589 = vmatpush1.msra.mxu0 0.0
        %590 = vmatprep.subr.mxu0 0.0
        %591 = vmatpush1.msra.mxu0 0.0
        %592 = vmatprep.subr.mxu0 0.0
        %593 = vmatpush1.msra.mxu0 0.0
        %594 = vmatprep.subr.mxu0 0.0
        %595 = vmatpush1.msra.mxu0 0.0
        %596 = vmatprep.subr.mxu0 0.0
        %597 = vmatpush1.msra.mxu0 0.0
        %598 = vmatprep.subr.mxu0 0.0
        %599 = vmatpush1.msra.mxu0 0.0
        %600 = vmatprep.subr.mxu0 0.0
        %601 = vmatpush1.msra.mxu0 0.0
        %602 = vmatprep.mubr.f32.mxu0 0.0
        %603 = vmatmul.mubr.f32.gmra.mrb[0].mxu0 %v536
        %v604 = vpop.f32.mrb[0].mxu0
        %v605 = vadd.f32 0.0, %v604
        %v606 = vpop.f32.mrb[0].mxu0
        %607 = vdwg.mxu0
        %608 = vrot.lane.b32.xlu0 %v277, 96
        %v609 = vpop.permute.xlu0 %608
        %610 = vrot.lane.b32.xlu0 %v273, 32
        %v611 = vpop.permute.xlu0 %610
        %v612 = vsel %vm281, %v609, 0
        %v614 = vsel %vm281, %v611, 0
        %616 = vmatprep.subr.mxu0 0.0
        %617 = vmatpush1.xpose.msra.mxu0 %v614
        %618 = vmatprep.subr.mxu0 0.0
        %619 = vmatpush1.xpose.msra.mxu0 0.0
        %620 = vmatprep.subr.mxu0 0.0
        %621 = vmatpush1.xpose.msra.mxu0 0.0
        %622 = vmatprep.subr.mxu0 0.0
        %623 = vmatpush1.xpose.msra.mxu0 0.0
        %624 = vmatprep.subr.mxu0 0.0
        %625 = vmatpush1.xpose.msra.mxu0 0.0
        %626 = vmatprep.subr.mxu0 0.0
        %627 = vmatpush1.xpose.msra.mxu0 0.0
        %628 = vmatprep.subr.mxu0 0.0
        %629 = vmatpush1.xpose.msra.mxu0 0.0
        %630 = vmatprep.subr.mxu0 0.0
        %631 = vmatpush1.xpose.msra.mxu0 0.0
        %632 = vmatprep.subr.mxu0 0.0
        %633 = vmatpush1.xpose.msra.mxu0 0.0
        %634 = vmatprep.subr.mxu0 0.0
        %635 = vmatpush1.xpose.msra.mxu0 0.0
        %636 = vmatprep.subr.mxu0 0.0
        %637 = vmatpush1.xpose.msra.mxu0 0.0
        %638 = vmatprep.subr.mxu0 0.0
        %639 = vmatpush1.xpose.msra.mxu0 0.0
        %640 = vmatprep.subr.mxu0 0.0
        %641 = vmatpush1.xpose.msra.mxu0 0.0
        %642 = vmatprep.subr.mxu0 0.0
        %643 = vmatpush1.xpose.msra.mxu0 0.0
        %644 = vmatprep.subr.mxu0 0.0
        %645 = vmatpush1.xpose.msra.mxu0 0.0
        %646 = vmatprep.subr.mxu0 0.0
        %647 = vmatpush1.xpose.msra.mxu0 0.0
        %648 = vmatprep.subr.mxu0 0.0
        %649 = vmatpush1.xpose.msra.mxu0 0.0
        %650 = vmatprep.subr.mxu0 0.0
        %651 = vmatpush1.xpose.msra.mxu0 0.0
        %652 = vmatprep.subr.mxu0 0.0
        %653 = vmatpush1.xpose.msra.mxu0 0.0
        %654 = vmatprep.subr.mxu0 0.0
        %655 = vmatpush1.xpose.msra.mxu0 0.0
        %656 = vmatprep.subr.mxu0 0.0
        %657 = vmatpush1.xpose.msra.mxu0 0.0
        %658 = vmatprep.subr.mxu0 0.0
        %659 = vmatpush1.xpose.msra.mxu0 0.0
        %660 = vmatprep.subr.mxu0 0.0
        %661 = vmatpush1.xpose.msra.mxu0 0.0
        %662 = vmatprep.subr.mxu0 0.0
        %663 = vmatpush1.xpose.msra.mxu0 0.0
        %664 = vmatprep.subr.mxu0 0.0
        %665 = vmatpush1.xpose.msra.mxu0 0.0
        %666 = vmatprep.subr.mxu0 0.0
        %667 = vmatpush1.xpose.msra.mxu0 0.0
        %668 = vmatprep.subr.mxu0 0.0
        %669 = vmatpush1.xpose.msra.mxu0 0.0
        %670 = vmatprep.subr.mxu0 0.0
        %671 = vmatpush1.xpose.msra.mxu0 0.0
        %672 = vmatprep.subr.mxu0 0.0
        %673 = vmatpush1.xpose.msra.mxu0 0.0
        %674 = vmatprep.subr.mxu0 0.0
        %675 = vmatpush1.xpose.msra.mxu0 0.0
        %676 = vmatprep.subr.mxu0 0.0
        %677 = vmatpush1.xpose.msra.mxu0 0.0
        %678 = vmatprep.subr.mxu0 0.0
        %679 = vmatpush1.xpose.msra.mxu0 0.0
        %680 = vmatprep.mubr.f32.mxu0 0.0
        %681 = vmatmul.mubr.f32.gmra.mrb[0].mxu0 %v612
        %v682 = vpop.f32.mrb[0].mxu0
        %v683 = vadd.f32 0.0, %v682
        %v684 = vpop.f32.mrb[0].mxu0
        %685 = vdwg.mxu0
        %v686 = vsel %vm357, %v683, -inf
        %687 = vmax.xlane.f32.xlu0 %v686
        %v688 = vpop.xlane.xlu0 %687
        %v689 = vsub.f32 %v683, %v688
        %v690 = vmul.f32 %v689, 1.442695
        %v691 = vpow.pop %v690
        %v692 = vsel %vm357, %v691, 0.0
        %693 = vadd.xlane.f32.xlu0 %v692
        %v694 = vpop.xlane.xlu0 %693
        %v695 = vrcp.pop %v694
        %v696 = vmul.f32 %v691, %v695
        %697 = vrot.lane.b32.xlu0 %v275, 96
        %v698 = vpop.permute.xlu0 %697
        %v701 = vsel %vm357, %v696, 0
        %703 = vmatprep.subr.mxu0 0.0
        %704 = vmatpush1.msra.mxu0 %v698
        %705 = vmatprep.subr.mxu0 0.0
        %706 = vmatpush1.msra.mxu0 0.0
        %707 = vmatprep.subr.mxu0 0.0
        %708 = vmatpush1.msra.mxu0 0.0
        %709 = vmatprep.subr.mxu0 0.0
        %710 = vmatpush1.msra.mxu0 0.0
        %711 = vmatprep.subr.mxu0 0.0
        %712 = vmatpush1.msra.mxu0 0.0
        %713 = vmatprep.subr.mxu0 0.0
        %714 = vmatpush1.msra.mxu0 0.0
        %715 = vmatprep.subr.mxu0 0.0
        %716 = vmatpush1.msra.mxu0 0.0
        %717 = vmatprep.subr.mxu0 0.0
        %718 = vmatpush1.msra.mxu0 0.0
        %719 = vmatprep.subr.mxu0 0.0
        %720 = vmatpush1.msra.mxu0 0.0
        %721 = vmatprep.subr.mxu0 0.0
        %722 = vmatpush1.msra.mxu0 0.0
        %723 = vmatprep.subr.mxu0 0.0
        %724 = vmatpush1.msra.mxu0 0.0
        %725 = vmatprep.subr.mxu0 0.0
        %726 = vmatpush1.msra.mxu0 0.0
        %727 = vmatprep.subr.mxu0 0.0
        %728 = vmatpush1.msra.mxu0 0.0
        %729 = vmatprep.subr.mxu0 0.0
        %730 = vmatpush1.msra.mxu0 0.0
        %731 = vmatprep.subr.mxu0 0.0
        %732 = vmatpush1.msra.mxu0 0.0
        %733 = vmatprep.subr.mxu0 0.0
        %734 = vmatpush1.msra.mxu0 0.0
        %735 = vmatprep.subr.mxu0 0.0
        %736 = vmatpush1.msra.mxu0 0.0
        %737 = vmatprep.subr.mxu0 0.0
        %738 = vmatpush1.msra.mxu0 0.0
        %739 = vmatprep.subr.mxu0 0.0
        %740 = vmatpush1.msra.mxu0 0.0
        %741 = vmatprep.subr.mxu0 0.0
        %742 = vmatpush1.msra.mxu0 0.0
        %743 = vmatprep.subr.mxu0 0.0
        %744 = vmatpush1.msra.mxu0 0.0
        %745 = vmatprep.subr.mxu0 0.0
        %746 = vmatpush1.msra.mxu0 0.0
        %747 = vmatprep.subr.mxu0 0.0
        %748 = vmatpush1.msra.mxu0 0.0
        %749 = vmatprep.subr.mxu0 0.0
        %750 = vmatpush1.msra.mxu0 0.0
        %751 = vmatprep.subr.mxu0 0.0
        %752 = vmatpush1.msra.mxu0 0.0
        %753 = vmatprep.subr.mxu0 0.0
        %754 = vmatpush1.msra.mxu0 0.0
        %755 = vmatprep.subr.mxu0 0.0
        %756 = vmatpush1.msra.mxu0 0.0
        %757 = vmatprep.subr.mxu0 0.0
        %758 = vmatpush1.msra.mxu0 0.0
        %759 = vmatprep.subr.mxu0 0.0
        %760 = vmatpush1.msra.mxu0 0.0
        %761 = vmatprep.subr.mxu0 0.0
        %762 = vmatpush1.msra.mxu0 0.0
        %763 = vmatprep.subr.mxu0 0.0
        %764 = vmatpush1.msra.mxu0 0.0
        %765 = vmatprep.subr.mxu0 0.0
        %766 = vmatpush1.msra.mxu0 0.0
        %767 = vmatprep.mubr.f32.mxu0 0.0
        %768 = vmatmul.mubr.f32.gmra.mrb[0].mxu0 %v701
        %v769 = vpop.f32.mrb[0].mxu0
        %v770 = vadd.f32 0.0, %v769
        %v771 = vpop.f32.mrb[0].mxu0
        %772 = vdwg.mxu0
        %773 = vrot.lane.b32.xlu0 %v277, 80
        %v774 = vpop.permute.xlu0 %773
        %775 = vrot.lane.b32.xlu0 %v273, 16
        %v776 = vpop.permute.xlu0 %775
        %v777 = vsel %vm281, %v774, 0
        %v779 = vsel %vm281, %v776, 0
        %781 = vmatprep.subr.mxu0 0.0
        %782 = vmatpush1.xpose.msra.mxu0 %v779
        %783 = vmatprep.subr.mxu0 0.0
        %784 = vmatpush1.xpose.msra.mxu0 0.0
        %785 = vmatprep.subr.mxu0 0.0
        %786 = vmatpush1.xpose.msra.mxu0 0.0
        %787 = vmatprep.subr.mxu0 0.0
        %788 = vmatpush1.xpose.msra.mxu0 0.0
        %789 = vmatprep.subr.mxu0 0.0
        %790 = vmatpush1.xpose.msra.mxu0 0.0
        %791 = vmatprep.subr.mxu0 0.0
        %792 = vmatpush1.xpose.msra.mxu0 0.0
        %793 = vmatprep.subr.mxu0 0.0
        %794 = vmatpush1.xpose.msra.mxu0 0.0
        %795 = vmatprep.subr.mxu0 0.0
        %796 = vmatpush1.xpose.msra.mxu0 0.0
        %797 = vmatprep.subr.mxu0 0.0
        %798 = vmatpush1.xpose.msra.mxu0 0.0
        %799 = vmatprep.subr.mxu0 0.0
        %800 = vmatpush1.xpose.msra.mxu0 0.0
        %801 = vmatprep.subr.mxu0 0.0
        %802 = vmatpush1.xpose.msra.mxu0 0.0
        %803 = vmatprep.subr.mxu0 0.0
        %804 = vmatpush1.xpose.msra.mxu0 0.0
        %805 = vmatprep.subr.mxu0 0.0
        %806 = vmatpush1.xpose.msra.mxu0 0.0
        %807 = vmatprep.subr.mxu0 0.0
        %808 = vmatpush1.xpose.msra.mxu0 0.0
        %809 = vmatprep.subr.mxu0 0.0
        %810 = vmatpush1.xpose.msra.mxu0 0.0
        %811 = vmatprep.subr.mxu0 0.0
        %812 = vmatpush1.xpose.msra.mxu0 0.0
        %813 = vmatprep.subr.mxu0 0.0
        %814 = vmatpush1.xpose.msra.mxu0 0.0
        %815 = vmatprep.subr.mxu0 0.0
        %816 = vmatpush1.xpose.msra.mxu0 0.0
        %817 = vmatprep.subr.mxu0 0.0
        %818 = vmatpush1.xpose.msra.mxu0 0.0
        %819 = vmatprep.subr.mxu0 0.0
        %820 = vmatpush1.xpose.msra.mxu0 0.0
        %821 = vmatprep.subr.mxu0 0.0
        %822 = vmatpush1.xpose.msra.mxu0 0.0
        %823 = vmatprep.subr.mxu0 0.0
        %824 = vmatpush1.xpose.msra.mxu0 0.0
        %825 = vmatprep.subr.mxu0 0.0
        %826 = vmatpush1.xpose.msra.mxu0 0.0
        %827 = vmatprep.subr.mxu0 0.0
        %828 = vmatpush1.xpose.msra.mxu0 0.0
        %829 = vmatprep.subr.mxu0 0.0
        %830 = vmatpush1.xpose.msra.mxu0 0.0
        %831 = vmatprep.subr.mxu0 0.0
        %832 = vmatpush1.xpose.msra.mxu0 0.0
        %833 = vmatprep.subr.mxu0 0.0
        %834 = vmatpush1.xpose.msra.mxu0 0.0
        %835 = vmatprep.subr.mxu0 0.0
        %836 = vmatpush1.xpose.msra.mxu0 0.0
        %837 = vmatprep.subr.mxu0 0.0
        %838 = vmatpush1.xpose.msra.mxu0 0.0
        %839 = vmatprep.subr.mxu0 0.0
        %840 = vmatpush1.xpose.msra.mxu0 0.0
        %841 = vmatprep.subr.mxu0 0.0
        %842 = vmatpush1.xpose.msra.mxu0 0.0
        %843 = vmatprep.subr.mxu0 0.0
        %844 = vmatpush1.xpose.msra.mxu0 0.0
        %845 = vmatprep.mubr.f32.mxu0 0.0
        %846 = vmatmul.mubr.f32.gmra.mrb[0].mxu0 %v777
        %v847 = vpop.f32.mrb[0].mxu0
        %v848 = vadd.f32 0.0, %v847
        %v849 = vpop.f32.mrb[0].mxu0
        %850 = vdwg.mxu0
        %v851 = vsel %vm357, %v848, -inf
        %852 = vmax.xlane.f32.xlu0 %v851
        %v853 = vpop.xlane.xlu0 %852
        %v854 = vsub.f32 %v848, %v853
        %v855 = vmul.f32 %v854, 1.442695
        %v856 = vpow.pop %v855
        %v857 = vsel %vm357, %v856, 0.0
        %858 = vadd.xlane.f32.xlu0 %v857
        %v859 = vpop.xlane.xlu0 %858
        %v860 = vrcp.pop %v859
        %v861 = vmul.f32 %v856, %v860
        %862 = vrot.lane.b32.xlu0 %v275, 80
        %v863 = vpop.permute.xlu0 %862
        %v866 = vsel %vm357, %v861, 0
        %868 = vmatprep.subr.mxu0 0.0
        %869 = vmatpush1.msra.mxu0 %v863
        %870 = vmatprep.subr.mxu0 0.0
        %871 = vmatpush1.msra.mxu0 0.0
        %872 = vmatprep.subr.mxu0 0.0
        %873 = vmatpush1.msra.mxu0 0.0
        %874 = vmatprep.subr.mxu0 0.0
        %875 = vmatpush1.msra.mxu0 0.0
        %876 = vmatprep.subr.mxu0 0.0
        %877 = vmatpush1.msra.mxu0 0.0
        %878 = vmatprep.subr.mxu0 0.0
        %879 = vmatpush1.msra.mxu0 0.0
        %880 = vmatprep.subr.mxu0 0.0
        %881 = vmatpush1.msra.mxu0 0.0
        %882 = vmatprep.subr.mxu0 0.0
        %883 = vmatpush1.msra.mxu0 0.0
        %884 = vmatprep.subr.mxu0 0.0
        %885 = vmatpush1.msra.mxu0 0.0
        %886 = vmatprep.subr.mxu0 0.0
        %887 = vmatpush1.msra.mxu0 0.0
        %888 = vmatprep.subr.mxu0 0.0
        %889 = vmatpush1.msra.mxu0 0.0
        %890 = vmatprep.subr.mxu0 0.0
        %891 = vmatpush1.msra.mxu0 0.0
        %892 = vmatprep.subr.mxu0 0.0
        %893 = vmatpush1.msra.mxu0 0.0
        %894 = vmatprep.subr.mxu0 0.0
        %895 = vmatpush1.msra.mxu0 0.0
        %896 = vmatprep.subr.mxu0 0.0
        %897 = vmatpush1.msra.mxu0 0.0
        %898 = vmatprep.subr.mxu0 0.0
        %899 = vmatpush1.msra.mxu0 0.0
        %900 = vmatprep.subr.mxu0 0.0
        %901 = vmatpush1.msra.mxu0 0.0
        %902 = vmatprep.subr.mxu0 0.0
        %903 = vmatpush1.msra.mxu0 0.0
        %904 = vmatprep.subr.mxu0 0.0
        %905 = vmatpush1.msra.mxu0 0.0
        %906 = vmatprep.subr.mxu0 0.0
        %907 = vmatpush1.msra.mxu0 0.0
        %908 = vmatprep.subr.mxu0 0.0
        %909 = vmatpush1.msra.mxu0 0.0
        %910 = vmatprep.subr.mxu0 0.0
        %911 = vmatpush1.msra.mxu0 0.0
        %912 = vmatprep.subr.mxu0 0.0
        %913 = vmatpush1.msra.mxu0 0.0
        %914 = vmatprep.subr.mxu0 0.0
        %915 = vmatpush1.msra.mxu0 0.0
        %916 = vmatprep.subr.mxu0 0.0
        %917 = vmatpush1.msra.mxu0 0.0
        %918 = vmatprep.subr.mxu0 0.0
        %919 = vmatpush1.msra.mxu0 0.0
        %920 = vmatprep.subr.mxu0 0.0
        %921 = vmatpush1.msra.mxu0 0.0
        %922 = vmatprep.subr.mxu0 0.0
        %923 = vmatpush1.msra.mxu0 0.0
        %924 = vmatprep.subr.mxu0 0.0
        %925 = vmatpush1.msra.mxu0 0.0
        %926 = vmatprep.subr.mxu0 0.0
        %927 = vmatpush1.msra.mxu0 0.0
        %928 = vmatprep.subr.mxu0 0.0
        %929 = vmatpush1.msra.mxu0 0.0
        %930 = vmatprep.subr.mxu0 0.0
        %931 = vmatpush1.msra.mxu0 0.0
        %932 = vmatprep.mubr.f32.mxu0 0.0
        %933 = vmatmul.mubr.f32.gmra.mrb[0].mxu0 %v866
        %v934 = vpop.f32.mrb[0].mxu0
        %v935 = vadd.f32 0.0, %v934
        %v936 = vpop.f32.mrb[0].mxu0
        %937 = vdwg.mxu0
        %939 = vrot.lane.b32.xlu0 %v605, 16
        %v940 = vpop.permute.xlu0 %939
        %943 = vrot.lane.b32.xlu0 %v770, 32
        %v944 = vpop.permute.xlu0 %943
        %947 = vrot.lane.b32.xlu0 %v935, 48
        %v948 = vpop.permute.xlu0 %947
        %v950 = vsel %vm281, %v439, %v940
        %v951 = vsel %vm202, %v950, %v944
        %vm952 = vcmask 392192
        %v953 = vsel %vm952, %v951, %v948
        %v954 = vld [vmem:[%s2] sm:$0xff]
        %v955 = vld [vmem:[%s2 + $0x8] sm:$0xff]
        %v956 = vld [vmem:[%s2 + $0x10] sm:$0xff]
        %v957 = vld [vmem:[%s2 + $0x18] sm:$0xff]
        %v958 = vld [vmem:[%s2 + $0x20] sm:$0xff]
        %v959 = vld [vmem:[%s2 + $0x28] sm:$0xff]
        %v960 = vld [vmem:[%s2 + $0x30] sm:$0xff]
        %v961 = vld [vmem:[%s2 + $0x38] sm:$0xff]
        %v962 = vld [vmem:[%s3] sm:$0x1]
        %v964 = vlaneseq
        %v965 = vshrl.u32 %v964, 7
        %v966 = vsub.s32 0, %v965
        %v967 = vrot.slane %v962, %v966
        %vm969 = vcmask 523264
        %v971 = vsel %vm969, %v953, 0
        %973 = vmatprep.subr.mxu0 0.0
        %974 = vmatpush1.msra.mxu0 %v954
        %975 = vmatprep.subr.mxu0 0.0
        %976 = vmatpush1.msra.mxu0 %v955
        %977 = vmatprep.subr.mxu0 0.0
        %978 = vmatpush1.msra.mxu0 %v956
        %979 = vmatprep.subr.mxu0 0.0
        %980 = vmatpush1.msra.mxu0 %v957
        %981 = vmatprep.subr.mxu0 0.0
        %982 = vmatpush1.msra.mxu0 %v958
        %983 = vmatprep.subr.mxu0 0.0
        %984 = vmatpush1.msra.mxu0 %v959
        %985 = vmatprep.subr.mxu0 0.0
        %986 = vmatpush1.msra.mxu0 %v960
        %987 = vmatprep.subr.mxu0 0.0
        %988 = vmatpush1.msra.mxu0 %v961
        %989 = vmatprep.subr.mxu0 0.0
        %990 = vmatpush1.msra.mxu0 0.0
        %991 = vmatprep.subr.mxu0 0.0
        %992 = vmatpush1.msra.mxu0 0.0
        %993 = vmatprep.subr.mxu0 0.0
        %994 = vmatpush1.msra.mxu0 0.0
        %995 = vmatprep.subr.mxu0 0.0
        %996 = vmatpush1.msra.mxu0 0.0
        %997 = vmatprep.subr.mxu0 0.0
        %998 = vmatpush1.msra.mxu0 0.0
        %999 = vmatprep.subr.mxu0 0.0
        %1000 = vmatpush1.msra.mxu0 0.0
        %1001 = vmatprep.subr.mxu0 0.0
        %1002 = vmatpush1.msra.mxu0 0.0
        %1003 = vmatprep.subr.mxu0 0.0
        %1004 = vmatpush1.msra.mxu0 0.0
        %1005 = vmatprep.subr.mxu0 0.0
        %1006 = vmatpush1.msra.mxu0 0.0
        %1007 = vmatprep.subr.mxu0 0.0
        %1008 = vmatpush1.msra.mxu0 0.0
        %1009 = vmatprep.subr.mxu0 0.0
        %1010 = vmatpush1.msra.mxu0 0.0
        %1011 = vmatprep.subr.mxu0 0.0
        %1012 = vmatpush1.msra.mxu0 0.0
        %1013 = vmatprep.subr.mxu0 0.0
        %1014 = vmatpush1.msra.mxu0 0.0
        %1015 = vmatprep.subr.mxu0 0.0
        %1016 = vmatpush1.msra.mxu0 0.0
        %1017 = vmatprep.subr.mxu0 0.0
        %1018 = vmatpush1.msra.mxu0 0.0
        %1019 = vmatprep.subr.mxu0 0.0
        %1020 = vmatpush1.msra.mxu0 0.0
        %1021 = vmatprep.subr.mxu0 0.0
        %1022 = vmatpush1.msra.mxu0 0.0
        %1023 = vmatprep.subr.mxu0 0.0
        %1024 = vmatpush1.msra.mxu0 0.0
        %1025 = vmatprep.subr.mxu0 0.0
        %1026 = vmatpush1.msra.mxu0 0.0
        %1027 = vmatprep.subr.mxu0 0.0
        %1028 = vmatpush1.msra.mxu0 0.0
        %1029 = vmatprep.subr.mxu0 0.0
        %1030 = vmatpush1.msra.mxu0 0.0
        %1031 = vmatprep.subr.mxu0 0.0
        %1032 = vmatpush1.msra.mxu0 0.0
        %1033 = vmatprep.subr.mxu0 0.0
        %1034 = vmatpush1.msra.mxu0 0.0
        %1035 = vmatprep.subr.mxu0 0.0
        %1036 = vmatpush1.msra.mxu0 0.0
        %1037 = vmatprep.mubr.f32.mxu0 0.0
        %1038 = vmatmul.mubr.f32.gmra.mrb[0].mxu0 %v971
        %v1039 = vpop.f32.mrb[0].mxu0
        %v1040 = vadd.f32 %v967, %v1039
        %v1041 = vpop.f32.mrb[0].mxu0
        %1042 = vdwg.mxu0
        %1043 = vst.msk [vmem:[%s188] sm:$0xff] %vm202, %v1040
        %s1044 = sand.u32 %s115, 1
        %s1045 = scalar_lea.sflag [#allocation3], %s1044
        %s1046 = sand.u32 %s115, 1
        %s1047 = smul.addr %s1046, 8
        %s1048 = scalar_lea.vmem [#allocation2], %s1047
        // Predicated region
        $region37: #{tpu_custom_call.1} parent=35 // pred_check
          %p1049 = pneg %p125
        $region38: #{tpu_custom_call.1} parent=35 // pred_check_branch
          %1051 = sbr.rel (%p1049) target = $region40
        $region39: #{tpu_custom_call.1} parent=35 // pred_region
          %s1053 = ssub.s32 128, 128
          %1054 = vsyncadd %s1045, %s1053
          %s1055 = smul.addr %s18, 128
          %s1056 = scalar_lea.hbm %s4, %s1055
          %s1058 = sshll.u32 %s1048, 4
          %s1059 = int_to_ptr.vmem [resolvable:$true] %s1058
          %1061 = dma.vmem_to_hbm [thread:$0]  %s1059, 128, %s1056, %s1045
        $region40: #{tpu_custom_call.1} parent=35 // pred_fallthru
          _
      $region36: #{tpu_custom_call.1} parent=5 // pred_fallthru
        _
      %p1062 = scmp.le.s32.totalorder 2, %s13
      // Predicated region
      $region41: #{tpu_custom_call.1} parent=5 // pred_check
        %p1063 = pneg %p1062
      $region42: #{tpu_custom_call.1} parent=5 // pred_check_branch
        %1065 = sbr.rel (%p1063) target = $region44
      $region43: #{tpu_custom_call.1} parent=5 // pred_region
        %s1066 = ssub.s32 %s13, 2
        // Predicated region
        $region45: #{tpu_custom_call.1} parent=43 // pred_check
          %p1067 = pneg %p131
        $region46: #{tpu_custom_call.1} parent=43 // pred_check_branch
          %1069 = sbr.rel (%p1067) target = $region48
        $region47: #{tpu_custom_call.1} parent=43 // pred_region
          %s1070 = sand.u32 %s116, 1
          %s1071 = scalar_lea.sflag [#allocation3], %s1070
          %s1072 = sand.u32 %s116, 1
          %s1073 = smul.addr %s1072, 8
          %s1074 = scalar_lea.vmem [#allocation2], %s1073
          %1075 = dma.done %s1071, 128
        $region48: #{tpu_custom_call.1} parent=43 // pred_fallthru
          _
      $region44: #{tpu_custom_call.1} parent=5 // pred_fallthru
        _
    $region6: #{tpu_custom_call.1} parent=1 // loop_footer
      %s17 = sadd.s32 1, %s13
    $region7: #{tpu_custom_call.1} parent=1 // loop_footer_branch
      %12 = sbr.rel target = $region3
    $region8: #{tpu_custom_call.1} parent=1 // loop_exit
      _
    %1076 = vsyncpa [#allocation3], 1
    %s1077 = scalar_lea.sflag [#allocation3], 1
    %1078 = vsyncpa %s1077, 1

</llo_original>
